<compile_context>
chip_gen: v7x
topology: tpu7x:2x2x1
jax: 0.10.0
libtpu: 0.0.40
codegen_flags: <defaults>
</compile_context>

<pallas_src>
import jax
import jax.numpy as jnp
from jax.experimental import pallas as pl
from jax.experimental.pallas import tpu as pltpu


def _attention_kernel(vi_ref, vq_ref, hq_ref, wi_ref, bi_ref, wat_ref, ba_ref,
                      o_ref):
    # vi_ref : (BB, N, E) bf16     vq_ref : (BB, 1, E) f32
    # hq_ref : (BB, 1, C) f32 (precomputed ff_questions(vq))
    # wi_ref : (E, C) bf16         bi_ref : (1, C) f32
    # wat_ref: (1, C) f32 (W_attention transposed)   ba_ref: (1, 1) f32
    # o_ref  : (BB, 1, E) f32
    bb, n, e = vi_ref.shape
    c = wi_ref.shape[1]

    vi = vi_ref[...]                                                # (BB, N, E) bf16

    # hi = ff_image(vi): one MXU dot with M = BB*N rows, f32 accumulation.
    hi = jnp.dot(vi.reshape(bb * n, e), wi_ref[...],
                 preferred_element_type=jnp.float32)                # (BB*N, C)
    hi = (hi + bi_ref[...]).reshape(bb, n, c)                       # (BB, N, C)

    # ha = tanh(hi + hq); hq was hoisted out of the kernel.  tanh -> EUP slot.
    ha = jnp.tanh(hi + hq_ref[...])                                 # (BB, N, C) f32
    # TODO(synk): nn.Dropout(p=0.5) is identity at inference; a training-mode
    # mask (pltpu.prng_seed + prng_random_bits) is intentionally omitted.

    # attention logits s = ff_attention(ha), flash-style 'bqd,bkd->bqk' (q=1).
    wat = jnp.broadcast_to(wat_ref[...][None], (bb, 1, c))          # (BB, 1, C)
    s = jnp.einsum('bqc,bnc->bqn', wat, ha,
                   preferred_element_type=jnp.float32) + ba_ref[...]  # (BB, 1, N)

    # softmax over the N image positions (lane axis) -- numerically stable,
    # normalization deferred to a single reciprocal scale of the result.
    m = jnp.max(s, axis=-1, keepdims=True)                          # (BB, 1, 1)
    p = jnp.exp(s - m)                                              # (BB, 1, N)
    sum_p = jnp.sum(p, axis=-1, keepdims=True)                      # (BB, 1, 1)

    # attended feature as an MXU dot (not a VPU multiply + XLU reduce).
    att = jnp.einsum('bqn,bne->bqe', p.astype(vi.dtype), vi,
                     preferred_element_type=jnp.float32)            # (BB, 1, E)
    att = att * pl.reciprocal(sum_p, approx=True)

    # residual question vector
    o_ref[...] = (att + vq_ref[...]).astype(o_ref.dtype)


def _pick_block_b(B, target):
    """Largest divisor of B that is <= target while keeping >= 2 grid steps
    (so the 'parallel' batch axis can split across v7x's two TensorCores)."""
    divs = [d for d in range(1, B + 1) if B % d == 0]
    cands = [d for d in divs if d <= target and B // d >= 2]
    if not cands:
        cands = [d for d in divs if d <= target] or [1]
    return max(cands)


def attention_forward(vi, vq, params, *, block_b=8):
    """vi: (B, N, E) image features, vq: (B, E) question vector -> u: (B, E)."""
    B, N, E = vi.shape
    wi, bi = params["ff_image"]        # (E, C), (C,)
    wq, bq = params["ff_questions"]    # (E, C), (C,)
    wa, ba = params["ff_attention"]    # (C, 1), (1,)
    C = wi.shape[-1]

    # Hoisted question projection: one batched XLA matmul for the whole batch
    # instead of an M=1 MXU matvec per grid step inside the kernel.
    hq = (vq @ wq + bq).reshape(B, 1, C).astype(jnp.float32)

    bb = _pick_block_b(B, block_b)
    grid = (B // bb,)

    # bf16 at the dot inputs (dominant HBM stream + full-rate MXU); f32 accum.
    vi_bf16 = vi.astype(jnp.bfloat16)
    wi_bf16 = wi.astype(jnp.bfloat16)

    out = pl.pallas_call(
        _attention_kernel,
        out_shape=jax.ShapeDtypeStruct((B, 1, E), vq.dtype),
        grid=grid,
        in_specs=[
            pl.BlockSpec((bb, N, E), lambda b: (b, 0, 0)),   # vi (bf16, streamed)
            pl.BlockSpec((bb, 1, E), lambda b: (b, 0, 0)),   # vq (f32, residual)
            pl.BlockSpec((bb, 1, C), lambda b: (b, 0, 0)),   # hq (f32, precomputed)
            pl.BlockSpec((E, C), lambda b: (0, 0)),          # W_image (bf16, grid-resident)
            pl.BlockSpec((1, C), lambda b: (0, 0)),          # b_image
            pl.BlockSpec((1, C), lambda b: (0, 0)),          # W_attention^T (f32)
            pl.BlockSpec((1, 1), lambda b: (0, 0)),          # b_attention
        ],
        out_specs=pl.BlockSpec((bb, 1, E), lambda b: (b, 0, 0)),
        compiler_params=pltpu.CompilerParams(
            dimension_semantics=("parallel",),
            vmem_limit_bytes=32 * 1024 * 1024,
        ),
    )(vi_bf16, vq.reshape(B, 1, E), hq, wi_bf16,
      bi.reshape(1, C), wa.T, ba.reshape(1, 1))
    return out.reshape(B, E)


def attention_reference_f32(vi, vq, params):
    """Pure-JAX f32 reference (exact module semantics)."""
    wi, bi = params["ff_image"]
    wq, bq = params["ff_questions"]
    wa, ba = params["ff_attention"]
    hi = vi @ wi + bi
    hq = (vq @ wq + bq)[:, None, :]
    ha = jnp.tanh(hi + hq)
    s = ha @ wa + ba                              # (B, N, 1)
    pi = jax.nn.softmax(s, axis=1)
    return jnp.sum(pi * vi, axis=1) + vq


def attention_reference_bf16(vi, vq, params):
    """Reference with the same bf16-at-dot-inputs policy as the kernel."""
    wi, bi = params["ff_image"]
    wq, bq = params["ff_questions"]
    wa, ba = params["ff_attention"]
    vi_b = vi.astype(jnp.bfloat16)
    hi = jnp.dot(vi_b, wi.astype(jnp.bfloat16),
                 preferred_element_type=jnp.float32) + bi
    hq = (vq @ wq + bq)[:, None, :]
    ha = jnp.tanh(hi + hq)
    s = jnp.dot(ha, wa, preferred_element_type=jnp.float32) + ba   # (B, N, 1)
    m = jnp.max(s, axis=1, keepdims=True)
    p = jnp.exp(s - m)
    att = jnp.einsum('bno,bne->boe', p.astype(jnp.bfloat16), vi_b,
                     preferred_element_type=jnp.float32)[:, 0, :]
    att = att / jnp.sum(p, axis=1)
    return att + vq


if __name__ == "__main__":
    # Small shapes consistent with the module; E, C multiples of 128 for
    # lane-dense loads/stores, N a multiple of 8, B chosen so BB-blocking
    # leaves >= 2 grid steps.
    B, N, E, C = 8, 16, 128, 128

    key = jax.random.PRNGKey(0)
    k = jax.random.split(key, 8)
    params = {
        "ff_image": (jax.random.normal(k[0], (E, C), jnp.float32) / jnp.sqrt(E),
                     0.01 * jax.random.normal(k[1], (C,), jnp.float32)),
        "ff_questions": (jax.random.normal(k[2], (E, C), jnp.float32) / jnp.sqrt(E),
                         0.01 * jax.random.normal(k[3], (C,), jnp.float32)),
        "ff_attention": (jax.random.normal(k[4], (C, 1), jnp.float32) / jnp.sqrt(C),
                         0.01 * jax.random.normal(k[5], (1,), jnp.float32)),
    }
    vi = jax.random.normal(k[6], (B, N, E), jnp.float32)   # image region features
    vq = jax.random.normal(k[7], (B, E), jnp.float32)      # question embedding

    fwd = jax.jit(attention_forward)
    u = jax.block_until_ready(fwd(vi, vq, params))

    assert u.shape == (B, E), u.shape
    assert u.dtype == jnp.float32
    assert bool(jnp.all(jnp.isfinite(u)))

    # Strict check against a reference following the same bf16-at-dot policy.
    ref_b = attention_reference_bf16(vi, vq, params)
    assert bool(jnp.allclose(u, ref_b, rtol=1e-2, atol=1e-2)), \
        float(jnp.max(jnp.abs(u - ref_b)))
    # Looser check against exact f32 module semantics (bf16 cast error budget).
    ref_f = attention_reference_f32(vi, vq, params)
    assert bool(jnp.allclose(u, ref_f, rtol=5e-2, atol=5e-2)), \
        float(jnp.max(jnp.abs(u - ref_f)))
    print("KERNEL_OK")
</pallas_src>

<mosaic_0001>
module attributes {stable_mosaic.version = 11 : i64} {
  func.func @_attention_kernel(%arg0: i32, %arg1: memref<4x16x128xbf16, #tpu.memory_space<vmem>>, %arg2: memref<4x1x128xf32, #tpu.memory_space<vmem>>, %arg3: memref<4x1x128xf32, #tpu.memory_space<vmem>>, %arg4: memref<128x128xbf16, #tpu.memory_space<vmem>>, %arg5: memref<1x128xf32, #tpu.memory_space<vmem>>, %arg6: memref<1x128xf32, #tpu.memory_space<vmem>>, %arg7: memref<1x1xf32, #tpu.memory_space<vmem>>, %arg8: memref<4x1x128xf32, #tpu.memory_space<vmem>>) attributes {dimension_semantics = [#tpu.dimension_semantics<parallel>], iteration_bounds = array<i64: 2>, scalar_prefetch = 0 : i64, scratch_operands = 0 : i64, tpu.core_type = #tpu.core_type<tc>, window_params = [{transform_indices = @transform_0, window_bounds = array<i64: 4, 16, 128>}, {transform_indices = @transform_1, window_bounds = array<i64: 4, 1, 128>}, {transform_indices = @transform_2, window_bounds = array<i64: 4, 1, 128>}, {pipeline_mode = #tpu.pipeline_mode<synchronous>, transform_indices = @transform_3, window_bounds = array<i64: 128, 128>}, {pipeline_mode = #tpu.pipeline_mode<synchronous>, transform_indices = @transform_4, window_bounds = array<i64: 1, 128>}, {pipeline_mode = #tpu.pipeline_mode<synchronous>, transform_indices = @transform_5, window_bounds = array<i64: 1, 128>}, {pipeline_mode = #tpu.pipeline_mode<synchronous>, transform_indices = @transform_6, window_bounds = array<i64: 1, 1>}, {transform_indices = @transform_7, window_bounds = array<i64: 4, 1, 128>}]} {
    %c0 = arith.constant 0 : index
    %c0_0 = arith.constant 0 : index
    %c0_1 = arith.constant 0 : index
    %0 = vector.load %arg1[%c0, %c0_0, %c0_1] : memref<4x16x128xbf16, #tpu.memory_space<vmem>>, vector<4x16x128xbf16>
    %1 = vector.shape_cast %0 : vector<4x16x128xbf16> to vector<64x128xbf16>
    %c0_2 = arith.constant 0 : index
    %c0_3 = arith.constant 0 : index
    %2 = vector.load %arg4[%c0_2, %c0_3] : memref<128x128xbf16, #tpu.memory_space<vmem>>, vector<128x128xbf16>
    %cst = arith.constant dense<0.000000e+00> : vector<64x128xf32>
    %3 = tpu.matmul %1, %2, %cst {dimension_numbers = #tpu.dot_dimension_numbers<[1], [0], [0], [1], [0, 0, 1, 1], [], []>} : vector<64x128xbf16>, vector<128x128xbf16>, vector<64x128xf32> -> vector<64x128xf32>
    %c0_4 = arith.constant 0 : index
    %c0_5 = arith.constant 0 : index
    %4 = vector.load %arg5[%c0_4, %c0_5] : memref<1x128xf32, #tpu.memory_space<vmem>>, vector<1x128xf32>
    %5 = vector.broadcast %4 : vector<1x128xf32> to vector<64x128xf32>
    %6 = arith.addf %3, %5 : vector<64x128xf32>
    %7 = vector.shape_cast %6 : vector<64x128xf32> to vector<4x16x128xf32>
    %c0_6 = arith.constant 0 : index
    %c0_7 = arith.constant 0 : index
    %c0_8 = arith.constant 0 : index
    %8 = vector.load %arg3[%c0_6, %c0_7, %c0_8] : memref<4x1x128xf32, #tpu.memory_space<vmem>>, vector<4x1x128xf32>
    %9 = vector.broadcast %8 : vector<4x1x128xf32> to vector<4x16x128xf32>
    %10 = arith.addf %7, %9 : vector<4x16x128xf32>
    %11 = math.tanh %10 : vector<4x16x128xf32>
    %c0_9 = arith.constant 0 : index
    %c0_10 = arith.constant 0 : index
    %12 = vector.load %arg6[%c0_9, %c0_10] : memref<1x128xf32, #tpu.memory_space<vmem>>, vector<1x128xf32>
    %13 = vector.shape_cast %12 : vector<1x128xf32> to vector<1x1x128xf32>
    %14 = vector.shape_cast %13 : vector<1x1x128xf32> to vector<1x1x128xf32>
    %15 = vector.broadcast %14 : vector<1x1x128xf32> to vector<4x1x128xf32>
    "tpu.trace_start"() <{level = 10 : i32, message = "bqc,bnc->bqn"}> : () -> ()
    %cst_11 = arith.constant dense<0.000000e+00> : vector<4x1x16xf32>
    %16 = tpu.matmul %15, %11, %cst_11 {dimension_numbers = #tpu.dot_dimension_numbers<[2], [2], [1], [1], [0, 0, 0, 1, 1, 1], [0], [0]>} : vector<4x1x128xf32>, vector<4x16x128xf32>, vector<4x1x16xf32> -> vector<4x1x16xf32>
    "tpu.trace_stop"() : () -> ()
    %c0_12 = arith.constant 0 : index
    %c0_13 = arith.constant 0 : index
    %17 = vector.load %arg7[%c0_12, %c0_13] : memref<1x1xf32, #tpu.memory_space<vmem>>, vector<1x1xf32>
    %18 = vector.shape_cast %17 : vector<1x1xf32> to vector<1x1x1xf32>
    %19 = vector.broadcast %18 : vector<1x1x1xf32> to vector<4x1x16xf32>
    %20 = arith.addf %16, %19 : vector<4x1x16xf32>
    %cst_14 = arith.constant dense<0xFF800000> : vector<4x1xf32>
    %21 = vector.multi_reduction <maximumf>, %20, %cst_14 [2] : vector<4x1x16xf32> to vector<4x1xf32>
    %22 = vector.shape_cast %21 : vector<4x1xf32> to vector<4x1x1xf32>
    %23 = vector.broadcast %22 : vector<4x1x1xf32> to vector<4x1x16xf32>
    %24 = arith.subf %20, %23 : vector<4x1x16xf32>
    %25 = math.exp %24 : vector<4x1x16xf32>
    %cst_15 = arith.constant dense<0.000000e+00> : vector<4x1xf32>
    %26 = vector.multi_reduction <add>, %25, %cst_15 [2] : vector<4x1x16xf32> to vector<4x1xf32>
    %27 = vector.shape_cast %26 : vector<4x1xf32> to vector<4x1x1xf32>
    %28 = arith.truncf %25 : vector<4x1x16xf32> to vector<4x1x16xbf16>
    "tpu.trace_start"() <{level = 10 : i32, message = "bqn,bne->bqe"}> : () -> ()
    %cst_16 = arith.constant dense<0.000000e+00> : vector<4x1x128xf32>
    %29 = tpu.matmul %28, %0, %cst_16 {dimension_numbers = #tpu.dot_dimension_numbers<[2], [1], [1], [2], [0, 0, 0, 1, 1, 2], [0], [0]>} : vector<4x1x16xbf16>, vector<4x16x128xbf16>, vector<4x1x128xf32> -> vector<4x1x128xf32>
    "tpu.trace_stop"() : () -> ()
    %30 = tpu.reciprocal %27 {approx = true} : vector<4x1x1xf32> -> vector<4x1x1xf32>
    %31 = vector.broadcast %30 : vector<4x1x1xf32> to vector<4x1x128xf32>
    %32 = arith.mulf %29, %31 : vector<4x1x128xf32>
    %c0_17 = arith.constant 0 : index
    %c0_18 = arith.constant 0 : index
    %c0_19 = arith.constant 0 : index
    %33 = vector.load %arg2[%c0_17, %c0_18, %c0_19] : memref<4x1x128xf32, #tpu.memory_space<vmem>>, vector<4x1x128xf32>
    %34 = arith.addf %32, %33 : vector<4x1x128xf32>
    %c0_20 = arith.constant 0 : index
    %c0_21 = arith.constant 0 : index
    %c0_22 = arith.constant 0 : index
    %35 = vector.load %arg8[%c0_20, %c0_21, %c0_22] : memref<4x1x128xf32, #tpu.memory_space<vmem>>, vector<4x1x128xf32>
    tpu.vector_store %arg8[%c0_20, %c0_21, %c0_22], %34 {strides = array<i32>} : memref<4x1x128xf32, #tpu.memory_space<vmem>>, vector<4x1x128xf32>,
    return
  }
  func.func @transform_0(%arg0: i32) -> (i32, i32, i32) {
    %c0_i32 = arith.constant 0 : i32
    %c0_i32_0 = arith.constant 0 : i32
    %c0_i32_1 = arith.constant 0 : i32
    return %arg0, %c0_i32, %c0_i32_0 : i32, i32, i32
  }
  func.func @transform_1(%arg0: i32) -> (i32, i32, i32) {
    %c0_i32 = arith.constant 0 : i32
    %c0_i32_0 = arith.constant 0 : i32
    %c0_i32_1 = arith.constant 0 : i32
    return %arg0, %c0_i32, %c0_i32_0 : i32, i32, i32
  }
  func.func @transform_2(%arg0: i32) -> (i32, i32, i32) {
    %c0_i32 = arith.constant 0 : i32
    %c0_i32_0 = arith.constant 0 : i32
    %c0_i32_1 = arith.constant 0 : i32
    return %arg0, %c0_i32, %c0_i32_0 : i32, i32, i32
  }
  func.func @transform_3(%arg0: i32) -> (i32, i32) {
    %c0_i32 = arith.constant 0 : i32
    %c0_i32_0 = arith.constant 0 : i32
    %c0_i32_1 = arith.constant 0 : i32
    return %c0_i32, %c0_i32_0 : i32, i32
  }
  func.func @transform_4(%arg0: i32) -> (i32, i32) {
    %c0_i32 = arith.constant 0 : i32
    %c0_i32_0 = arith.constant 0 : i32
    %c0_i32_1 = arith.constant 0 : i32
    return %c0_i32, %c0_i32_0 : i32, i32
  }
  func.func @transform_5(%arg0: i32) -> (i32, i32) {
    %c0_i32 = arith.constant 0 : i32
    %c0_i32_0 = arith.constant 0 : i32
    %c0_i32_1 = arith.constant 0 : i32
    return %c0_i32, %c0_i32_0 : i32, i32
  }
  func.func @transform_6(%arg0: i32) -> (i32, i32) {
    %c0_i32 = arith.constant 0 : i32
    %c0_i32_0 = arith.constant 0 : i32
    %c0_i32_1 = arith.constant 0 : i32
    return %c0_i32, %c0_i32_0 : i32, i32
  }
  func.func @transform_7(%arg0: i32) -> (i32, i32, i32) {
    %c0_i32 = arith.constant 0 : i32
    %c0_i32_0 = arith.constant 0 : i32
    %c0_i32_1 = arith.constant 0 : i32
    return %arg0, %c0_i32, %c0_i32_0 : i32, i32, i32
  }
}

</mosaic_0001>

<llo_original>
// kernel: attention_forward.1
$region0: #{attention_forward.1}
  #allocation0 [shape = 'u32[]', space=smem, size = 0x4, offset = 0x4, fixed_abs, tag = 'smem constant byte address 0x4 - core index']
  #allocation1 [shape = 'u32[144,128]{1,0:T(1,128)}', space=vmem, size = 0x12000, scoped, tag = 'internal scratch']
  #allocation2 [shape = 'f32[1,1]{1,0:T(1,128)S(1)}', space=vmem, size = 0x200, scoped, tag = 'scoped memory for attention_forward.1']
  %s0 = inlined_call_operand.vmem [shape: bf16[8,16,128], index: 0, kind: input, shape index: {}]
  %s1 = inlined_call_operand.vmem [shape: f32[8,1,128], index: 1, kind: input, shape index: {}]
  %s2 = inlined_call_operand.vmem [shape: f32[8,1,128], index: 2, kind: input, shape index: {}]
  %s3 = inlined_call_operand.vmem [shape: bf16[128,128], index: 3, kind: input, shape index: {}]
  %s4 = inlined_call_operand.vmem [shape: f32[1,128], index: 4, kind: input, shape index: {}]
  %s5 = inlined_call_operand.vmem [shape: f32[1,128], index: 5, kind: input, shape index: {}]
  %s6 = inlined_call_operand.<no memory space> [shape: f32[1,1], index: 6, kind: input, shape index: {}]
  %s7 = inlined_call_operand.hbm [shape: f32[8,1,128], index: 7, kind: output, shape index: {}]
  %s8 = sld [smem:[#allocation0]]
  $region61: #{attention_forward.1} parent=0
    _
  %s10 = ssub.s32 1, %s8
  %s11 = scalar_select 0, %s10, %s8
  %v12 = vstv %s6
  %13 = vst [vmem:[#allocation2] sm:$0x1] %v12
  $region1: #{attention_forward.1} parent=0
    #allocation3 [shape = 'u8[4096]{0}', space=vmem, size = 0x1000, scoped, tag = 'output window, operand 0']
    #allocation4 [shape = 's32[2]{0}', space=sflag, size = 0x8, scoped, tag = 'scoped memory for attention_forward.1']
    %14 = vsyncpa [#allocation4], 0
    %s15 = scalar_lea.sflag [#allocation4], 1
    %16 = vsyncpa %s15, 0
    loop: start=0, step=1, limit=4
    $region2: #{attention_forward.1} parent=1 // loop_pre_header
      _
    $region3: #{attention_forward.1} parent=1 // loop_header
      %s18 = sphi 0, %s22
      %p19 = scmp.ge.s32.totalorder %s18, 4
      %s28 = sphi 0, %s30
      %s31 = sphi 0, %s28
      %s32 = sphi 0, %s31
      %s48 = sphi 0, %s32
      %s54 = sphi 0, %s56
      %s57 = sphi 0, %s54
      %s58 = sphi 0, %s57
      %s74 = sphi 0, %s58
      %s80 = sphi 0, %s82
      %s83 = sphi 0, %s80
      %s84 = sphi 0, %s83
      %s100 = sphi 0, %s84
      %s104 = sphi 0, %s104
      %s106 = sphi 0, %s104
      %s107 = sphi 0, %s106
      %s121 = sphi 0, %s107
      %s125 = sphi 0, %s125
      %s127 = sphi 0, %s125
      %s128 = sphi 0, %s127
      %s142 = sphi 0, %s128
      %s146 = sphi 0, %s146
      %s148 = sphi 0, %s146
      %s149 = sphi 0, %s148
      %s163 = sphi 0, %s149
      %s167 = sphi 0, %s167
      %s169 = sphi 0, %s167
      %s170 = sphi 0, %s169
      %s184 = sphi 0, %s170
      %s190 = sphi 0, %s192
      %s193 = sphi 0, %s190
      %s194 = sphi 0, %s193
      %s210 = sphi 0, %s194
    $region4: #{attention_forward.1} parent=1 // loop_header_branch
      %21 = sbr.rel (%p19) target = $region8
    $region5: #{attention_forward.1} parent=1 // loop_body
      %s23 = ssub.s32 %s18, 1
      %s24 = ssub.s32 %s18, 2
      %s25 = sadd.s32 %s18, 1
      %s26 = ssub.s32 %s18, %s25
      %p27 = scmp.eq.s32.totalorder %s26, 0
      %s29 = sadd.s32 %s28, 1
      %s30 = scalar_select %p27, %s28, %s29
      %p33 = pneg %p27
      %p34 = scmp.eq.s32.totalorder %s18, 1
      %p35 = por %p33, %p34
      %p36 = scmp.ne.s32.totalorder %s28, %s31
      %p37 = scmp.eq.s32.totalorder %s18, 0
      %p38 = por %p36, %p37
      %p39 = scmp.ne.s32.totalorder %s28, %s31
      %p40 = scmp.eq.s32.totalorder %s23, 1
      %p41 = por %p39, %p40
      %p42 = scmp.ne.s32.totalorder %s31, %s32
      %p43 = scmp.eq.s32.totalorder %s23, 0
      %p44 = por %p42, %p43
      %p45 = scmp.ne.s32.totalorder %s31, %s32
      %p46 = scmp.eq.s32.totalorder %s24, 1
      %p47 = por %p45, %p46
      %p49 = scmp.ne.s32.totalorder %s32, %s48
      %p50 = scmp.eq.s32.totalorder %s24, 0
      %p51 = por %p49, %p50
      %s52 = ssub.s32 %s18, %s25
      %p53 = scmp.eq.s32.totalorder %s52, 0
      %s55 = sadd.s32 %s54, 1
      %s56 = scalar_select %p53, %s54, %s55
      %p59 = pneg %p53
      %p60 = scmp.eq.s32.totalorder %s18, 1
      %p61 = por %p59, %p60
      %p62 = scmp.ne.s32.totalorder %s54, %s57
      %p63 = scmp.eq.s32.totalorder %s18, 0
      %p64 = por %p62, %p63
      %p65 = scmp.ne.s32.totalorder %s54, %s57
      %p66 = scmp.eq.s32.totalorder %s23, 1
      %p67 = por %p65, %p66
      %p68 = scmp.ne.s32.totalorder %s57, %s58
      %p69 = scmp.eq.s32.totalorder %s23, 0
      %p70 = por %p68, %p69
      %p71 = scmp.ne.s32.totalorder %s57, %s58
      %p72 = scmp.eq.s32.totalorder %s24, 1
      %p73 = por %p71, %p72
      %p75 = scmp.ne.s32.totalorder %s58, %s74
      %p76 = scmp.eq.s32.totalorder %s24, 0
      %p77 = por %p75, %p76
      %s78 = ssub.s32 %s18, %s25
      %p79 = scmp.eq.s32.totalorder %s78, 0
      %s81 = sadd.s32 %s80, 1
      %s82 = scalar_select %p79, %s80, %s81
      %p85 = pneg %p79
      %p86 = scmp.eq.s32.totalorder %s18, 1
      %p87 = por %p85, %p86
      %p88 = scmp.ne.s32.totalorder %s80, %s83
      %p89 = scmp.eq.s32.totalorder %s18, 0
      %p90 = por %p88, %p89
      %p91 = scmp.ne.s32.totalorder %s80, %s83
      %p92 = scmp.eq.s32.totalorder %s23, 1
      %p93 = por %p91, %p92
      %p94 = scmp.ne.s32.totalorder %s83, %s84
      %p95 = scmp.eq.s32.totalorder %s23, 0
      %p96 = por %p94, %p95
      %p97 = scmp.ne.s32.totalorder %s83, %s84
      %p98 = scmp.eq.s32.totalorder %s24, 1
      %p99 = por %p97, %p98
      %p101 = scmp.ne.s32.totalorder %s84, %s100
      %p102 = scmp.eq.s32.totalorder %s24, 0
      %p103 = por %p101, %p102
      %s105 = sadd.s32 %s104, 1
      %p108 = scmp.eq.s32.totalorder %s18, 1
      %p109 = scmp.ne.s32.totalorder %s104, %s106
      %p110 = scmp.eq.s32.totalorder %s18, 0
      %p111 = por %p109, %p110
      %p112 = scmp.ne.s32.totalorder %s104, %s106
      %p113 = scmp.eq.s32.totalorder %s23, 1
      %p114 = por %p112, %p113
      %p115 = scmp.ne.s32.totalorder %s106, %s107
      %p116 = scmp.eq.s32.totalorder %s23, 0
      %p117 = por %p115, %p116
      %p118 = scmp.ne.s32.totalorder %s106, %s107
      %p119 = scmp.eq.s32.totalorder %s24, 1
      %p120 = por %p118, %p119
      %p122 = scmp.ne.s32.totalorder %s107, %s121
      %p123 = scmp.eq.s32.totalorder %s24, 0
      %p124 = por %p122, %p123
      %s126 = sadd.s32 %s125, 1
      %p129 = scmp.eq.s32.totalorder %s18, 1
      %p130 = scmp.ne.s32.totalorder %s125, %s127
      %p131 = scmp.eq.s32.totalorder %s18, 0
      %p132 = por %p130, %p131
      %p133 = scmp.ne.s32.totalorder %s125, %s127
      %p134 = scmp.eq.s32.totalorder %s23, 1
      %p135 = por %p133, %p134
      %p136 = scmp.ne.s32.totalorder %s127, %s128
      %p137 = scmp.eq.s32.totalorder %s23, 0
      %p138 = por %p136, %p137
      %p139 = scmp.ne.s32.totalorder %s127, %s128
      %p140 = scmp.eq.s32.totalorder %s24, 1
      %p141 = por %p139, %p140
      %p143 = scmp.ne.s32.totalorder %s128, %s142
      %p144 = scmp.eq.s32.totalorder %s24, 0
      %p145 = por %p143, %p144
      %s147 = sadd.s32 %s146, 1
      %p150 = scmp.eq.s32.totalorder %s18, 1
      %p151 = scmp.ne.s32.totalorder %s146, %s148
      %p152 = scmp.eq.s32.totalorder %s18, 0
      %p153 = por %p151, %p152
      %p154 = scmp.ne.s32.totalorder %s146, %s148
      %p155 = scmp.eq.s32.totalorder %s23, 1
      %p156 = por %p154, %p155
      %p157 = scmp.ne.s32.totalorder %s148, %s149
      %p158 = scmp.eq.s32.totalorder %s23, 0
      %p159 = por %p157, %p158
      %p160 = scmp.ne.s32.totalorder %s148, %s149
      %p161 = scmp.eq.s32.totalorder %s24, 1
      %p162 = por %p160, %p161
      %p164 = scmp.ne.s32.totalorder %s149, %s163
      %p165 = scmp.eq.s32.totalorder %s24, 0
      %p166 = por %p164, %p165
      %s168 = sadd.s32 %s167, 1
      %p171 = scmp.eq.s32.totalorder %s18, 1
      %p172 = scmp.ne.s32.totalorder %s167, %s169
      %p173 = scmp.eq.s32.totalorder %s18, 0
      %p174 = por %p172, %p173
      %p175 = scmp.ne.s32.totalorder %s167, %s169
      %p176 = scmp.eq.s32.totalorder %s23, 1
      %p177 = por %p175, %p176
      %p178 = scmp.ne.s32.totalorder %s169, %s170
      %p179 = scmp.eq.s32.totalorder %s23, 0
      %p180 = por %p178, %p179
      %p181 = scmp.ne.s32.totalorder %s169, %s170
      %p182 = scmp.eq.s32.totalorder %s24, 1
      %p183 = por %p181, %p182
      %p185 = scmp.ne.s32.totalorder %s170, %s184
      %p186 = scmp.eq.s32.totalorder %s24, 0
      %p187 = por %p185, %p186
      %s188 = ssub.s32 %s18, %s25
      %p189 = scmp.eq.s32.totalorder %s188, 0
      %s191 = sadd.s32 %s190, 1
      %s192 = scalar_select %p189, %s190, %s191
      %p195 = pneg %p189
      %p196 = scmp.eq.s32.totalorder %s18, 1
      %p197 = por %p195, %p196
      %p198 = scmp.ne.s32.totalorder %s190, %s193
      %p199 = scmp.eq.s32.totalorder %s18, 0
      %p200 = por %p198, %p199
      %p201 = scmp.ne.s32.totalorder %s190, %s193
      %p202 = scmp.eq.s32.totalorder %s23, 1
      %p203 = por %p201, %p202
      %p204 = scmp.ne.s32.totalorder %s193, %s194
      %p205 = scmp.eq.s32.totalorder %s23, 0
      %p206 = por %p204, %p205
      %p207 = scmp.ne.s32.totalorder %s193, %s194
      %p208 = scmp.eq.s32.totalorder %s24, 1
      %p209 = por %p207, %p208
      %p211 = scmp.ne.s32.totalorder %s194, %s210
      %p212 = scmp.eq.s32.totalorder %s24, 0
      %p213 = por %p211, %p212
      %p214 = scmp.le.s32.totalorder 1, %s18
      %p215 = scmp.lt.s32.totalorder %s18, 3
      %p216 = pnand %p214, %p215
      %p217 = pneg %p216
      // Predicated region
      $region9: #{attention_forward.1} parent=5 // pred_check
        _
      $region10: #{attention_forward.1} parent=5 // pred_check_branch
        %219 = sbr.rel (%p216) target = $region12
      $region11: #{attention_forward.1} parent=5 // pred_region
        %s220 = ssub.s32 %s18, 1
        // Predicated region
        $region13: #{attention_forward.1} parent=11 // pred_check
          %p221 = pneg %p117
        $region14: #{attention_forward.1} parent=11 // pred_check_branch
          %223 = sbr.rel (%p221) target = $region16
        $region15: #{attention_forward.1} parent=11 // pred_region
          _
        $region16: #{attention_forward.1} parent=11 // pred_fallthru
          _
        // Predicated region
        $region17: #{attention_forward.1} parent=11 // pred_check
          %p224 = pneg %p138
        $region18: #{attention_forward.1} parent=11 // pred_check_branch
          %226 = sbr.rel (%p224) target = $region20
        $region19: #{attention_forward.1} parent=11 // pred_region
          _
        $region20: #{attention_forward.1} parent=11 // pred_fallthru
          _
        // Predicated region
        $region21: #{attention_forward.1} parent=11 // pred_check
          %p227 = pneg %p159
        $region22: #{attention_forward.1} parent=11 // pred_check_branch
          %229 = sbr.rel (%p227) target = $region24
        $region23: #{attention_forward.1} parent=11 // pred_region
          _
        $region24: #{attention_forward.1} parent=11 // pred_fallthru
          _
        // Predicated region
        $region25: #{attention_forward.1} parent=11 // pred_check
          %p230 = pneg %p180
        $region26: #{attention_forward.1} parent=11 // pred_check_branch
          %232 = sbr.rel (%p230) target = $region28
        $region27: #{attention_forward.1} parent=11 // pred_region
          _
        $region28: #{attention_forward.1} parent=11 // pred_fallthru
          _
      $region12: #{attention_forward.1} parent=5 // pred_fallthru
        _
      %p233 = scmp.lt.s32.totalorder %s18, 2
      // Predicated region
      $region29: #{attention_forward.1} parent=5 // pred_check
        %p234 = pneg %p233
      $region30: #{attention_forward.1} parent=5 // pred_check_branch
        %236 = sbr.rel (%p234) target = $region32
      $region31: #{attention_forward.1} parent=5 // pred_region
        // Predicated region
        $region33: #{attention_forward.1} parent=31 // pred_check
          %p237 = pneg %p38
        $region34: #{attention_forward.1} parent=31 // pred_check_branch
          %239 = sbr.rel (%p237) target = $region36
        $region35: #{attention_forward.1} parent=31 // pred_region
          %s240 = smul.u32 4, %s18
          %p241 = scmp.lt.s32.totalorder %s240, 7
          %s242 = scalar_select %p241, %s240, 7
          %s243 = smul.addr %s242, 2
          %s244 = smul.addr %s243, 4
          %s245 = scalar_lea.vmem %s0, %s244
          %s246 = smul.u32 4, %s18
        $region36: #{attention_forward.1} parent=31 // pred_fallthru
          _
        // Predicated region
        $region37: #{attention_forward.1} parent=31 // pred_check
          %p247 = pneg %p64
        $region38: #{attention_forward.1} parent=31 // pred_check_branch
          %249 = sbr.rel (%p247) target = $region40
        $region39: #{attention_forward.1} parent=31 // pred_region
          %s250 = smul.u32 4, %s18
          %p251 = scmp.lt.s32.totalorder %s250, 7
          %s252 = scalar_select %p251, %s250, 7
          %s253 = scalar_lea.vmem %s1, %s252
          %s254 = smul.u32 4, %s18
        $region40: #{attention_forward.1} parent=31 // pred_fallthru
          _
        // Predicated region
        $region41: #{attention_forward.1} parent=31 // pred_check
          %p255 = pneg %p90
        $region42: #{attention_forward.1} parent=31 // pred_check_branch
          %257 = sbr.rel (%p255) target = $region44
        $region43: #{attention_forward.1} parent=31 // pred_region
          %s258 = smul.u32 4, %s18
          %p259 = scmp.lt.s32.totalorder %s258, 7
          %s260 = scalar_select %p259, %s258, 7
          %s261 = scalar_lea.vmem %s2, %s260
          %s262 = smul.u32 4, %s18
        $region44: #{attention_forward.1} parent=31 // pred_fallthru
          _
      $region32: #{attention_forward.1} parent=5 // pred_fallthru
        _
      %p263 = scmp.le.s32.totalorder 1, %s18
      %p264 = scmp.lt.s32.totalorder %s18, 3
      %p265 = pnand %p263, %p264
      %p266 = pneg %p265
      // Predicated region
      $region45: #{attention_forward.1} parent=5 // pred_check
        _
      $region46: #{attention_forward.1} parent=5 // pred_check_branch
        %268 = sbr.rel (%p265) target = $region48
      $region47: #{attention_forward.1} parent=5 // pred_region
        %s269 = ssub.s32 %s18, 1
        %s270 = smul.u32 4, %s23
        %p271 = scmp.lt.s32.totalorder %s270, 7
        %s272 = scalar_select %p271, %s270, 7
        %s273 = smul.addr %s272, 2
        %s274 = smul.addr %s273, 4
        %s275 = scalar_lea.vmem %s0, %s274
        %p276 = pneg %p44
        %p277 = pneg %p41
        %s278 = smul.u32 4, %s23
        %p279 = scmp.lt.s32.totalorder %s278, 7
        %s280 = scalar_select %p279, %s278, 7
        %s281 = scalar_lea.vmem %s1, %s280
        %p282 = pneg %p70
        %p283 = pneg %p67
        %s284 = smul.u32 4, %s23
        %p285 = scmp.lt.s32.totalorder %s284, 7
        %s286 = scalar_select %p285, %s284, 7
        %s287 = scalar_lea.vmem %s2, %s286
        %p288 = pneg %p96
        %p289 = pneg %p93
        %p290 = pneg %p117
        %p291 = pneg %p114
        %p292 = pneg %p138
        %p293 = pneg %p135
        %p294 = pneg %p159
        %p295 = pneg %p156
        %p296 = pneg %p180
        %p297 = pneg %p177
        %p298 = pneg %p206
        %p299 = pneg %p203
        %s300 = sand.u32 %s193, 1
        %s301 = scalar_lea.sflag [#allocation4], %s300
        %s302 = sand.u32 %s193, 1
        %s303 = smul.addr %s302, 4
        %s304 = scalar_lea.vmem [#allocation3], %s303
        %s305 = smul.u32 4, %s23
        %p306 = scmp.lt.s32.totalorder %s305, 7
        %s307 = scalar_select %p306, %s305, 7
        %s308 = smul.addr %s307, 2
        %s309 = smul.addr %s308, 4
        %s310 = scalar_lea.vmem %s0, %s309
        %s311 = smul.u32 4, %s23
        %s312 = smul.u32 4, %s23
        %p313 = scmp.lt.s32.totalorder %s312, 7
        %s314 = scalar_select %p313, %s312, 7
        %s315 = scalar_lea.vmem %s1, %s314
        %s316 = smul.u32 4, %s23
        %s317 = smul.u32 4, %s23
        %p318 = scmp.lt.s32.totalorder %s317, 7
        %s319 = scalar_select %p318, %s317, 7
        %s320 = scalar_lea.vmem %s2, %s319
        %s321 = smul.u32 4, %s23
        %s322 = smul.u32 4, %s23
        %v324 = vld [vmem:[%s310] sm:$0xf]
        %v325 = vld [vmem:[%s310 + $0x4] sm:$0xf]
        %v326 = vld [vmem:[%s310 + $0x8] sm:$0xf]
        %v327 = vld [vmem:[%s310 + $0xc] sm:$0xf]
        %v328 = vld [vmem:[%s310 + $0x10] sm:$0xf]
        %v329 = vld [vmem:[%s310 + $0x14] sm:$0xf]
        %v330 = vld [vmem:[%s310 + $0x18] sm:$0xf]
        %v331 = vld [vmem:[%s310 + $0x1c] sm:$0xf]
        %v332 = vld [vmem:[%s3] sm:$0xf]
        %v333 = vld [vmem:[%s3 + $0x4] sm:$0xf]
        %v334 = vld [vmem:[%s3 + $0x8] sm:$0xf]
        %v335 = vld [vmem:[%s3 + $0xc] sm:$0xf]
        %v336 = vld [vmem:[%s3 + $0x10] sm:$0xf]
        %v337 = vld [vmem:[%s3 + $0x14] sm:$0xf]
        %v338 = vld [vmem:[%s3 + $0x18] sm:$0xf]
        %v339 = vld [vmem:[%s3 + $0x1c] sm:$0xf]
        %v340 = vld [vmem:[%s3 + $0x20] sm:$0xf]
        %v341 = vld [vmem:[%s3 + $0x24] sm:$0xf]
        %v342 = vld [vmem:[%s3 + $0x28] sm:$0xf]
        %v343 = vld [vmem:[%s3 + $0x2c] sm:$0xf]
        %v344 = vld [vmem:[%s3 + $0x30] sm:$0xf]
        %v345 = vld [vmem:[%s3 + $0x34] sm:$0xf]
        %v346 = vld [vmem:[%s3 + $0x38] sm:$0xf]
        %v347 = vld [vmem:[%s3 + $0x3c] sm:$0xf]
        %v348 = vld [vmem:[%s4] sm:$0x1]
        %v350 = vlaneseq
        %v351 = vshrl.u32 %v350, 7
        %v352 = vsub.s32 0, %v351
        %v353 = vrot.slane %v348, %v352
        %v363 = vunpack.c.l.b16 %v324
        %v364 = vunpack.c.l.b16 %v325
        %v365 = vunpack.c.l.b16 %v326
        %v366 = vunpack.c.l.b16 %v327
        %v367 = vunpack.c.l.b16 %v328
        %v368 = vunpack.c.l.b16 %v329
        %v369 = vunpack.c.l.b16 %v330
        %v370 = vunpack.c.l.b16 %v331
        %v371 = vpack.c.b16 %v364, %v363
        %v372 = vpack.c.b16 %v366, %v365
        %v373 = vpack.c.b16 %v368, %v367
        %v374 = vpack.c.b16 %v370, %v369
        %v395 = vunpack.c.l.b16 %v332
        %v396 = vunpack.c.l.b16 %v333
        %v397 = vunpack.c.l.b16 %v334
        %v398 = vunpack.c.l.b16 %v335
        %v399 = vunpack.c.l.b16 %v336
        %v400 = vunpack.c.l.b16 %v337
        %v401 = vunpack.c.l.b16 %v338
        %v402 = vunpack.c.l.b16 %v339
        %v403 = vunpack.c.l.b16 %v340
        %v404 = vunpack.c.l.b16 %v341
        %v405 = vunpack.c.l.b16 %v342
        %v406 = vunpack.c.l.b16 %v343
        %v407 = vunpack.c.l.b16 %v344
        %v408 = vunpack.c.l.b16 %v345
        %v409 = vunpack.c.l.b16 %v346
        %v410 = vunpack.c.l.b16 %v347
        %v411 = vpack.c.b16 %v396, %v395
        %v412 = vpack.c.b16 %v398, %v397
        %v413 = vpack.c.b16 %v400, %v399
        %v414 = vpack.c.b16 %v402, %v401
        %v415 = vpack.c.b16 %v404, %v403
        %v416 = vpack.c.b16 %v406, %v405
        %v417 = vpack.c.b16 %v408, %v407
        %v418 = vpack.c.b16 %v410, %v409
        %427 = vmatprep.subr.bf16.mxu0 0
        %428 = vmatpush1.bf16.msra.mxu0 %v411
        %429 = vmatprep.subr.bf16.mxu0 0
        %430 = vmatpush1.bf16.msra.mxu0 %v412
        %431 = vmatprep.subr.bf16.mxu0 0
        %432 = vmatpush1.bf16.msra.mxu0 %v413
        %433 = vmatprep.subr.bf16.mxu0 0
        %434 = vmatpush1.bf16.msra.mxu0 %v414
        %435 = vmatprep.subr.bf16.mxu0 0
        %436 = vmatpush1.bf16.msra.mxu0 %v415
        %437 = vmatprep.subr.bf16.mxu0 0
        %438 = vmatpush1.bf16.msra.mxu0 %v416
        %439 = vmatprep.subr.bf16.mxu0 0
        %440 = vmatpush1.bf16.msra.mxu0 %v417
        %441 = vmatprep.subr.bf16.mxu0 0
        %442 = vmatpush1.bf16.msra.mxu0 %v418
        %443 = vmatprep.subr.bf16.mxu0 0
        %444 = vmatpush1.bf16.msra.mxu0 0
        %445 = vmatprep.subr.bf16.mxu0 0
        %446 = vmatpush1.bf16.msra.mxu0 0
        %447 = vmatprep.subr.bf16.mxu0 0
        %448 = vmatpush1.bf16.msra.mxu0 0
        %449 = vmatprep.subr.bf16.mxu0 0
        %450 = vmatpush1.bf16.msra.mxu0 0
        %451 = vmatprep.subr.bf16.mxu0 0
        %452 = vmatpush1.bf16.msra.mxu0 0
        %453 = vmatprep.subr.bf16.mxu0 0
        %454 = vmatpush1.bf16.msra.mxu0 0
        %455 = vmatprep.subr.bf16.mxu0 0
        %456 = vmatpush1.bf16.msra.mxu0 0
        %457 = vmatprep.subr.bf16.mxu0 0
        %458 = vmatpush1.bf16.msra.mxu0 0
        %459 = vmatprep.mubr.bf16.mxu0 0
        %460 = vmatmul.mubr.bf16.gmra.mrb[0].mxu0 %v371
        %v461 = vpop.f32.mrb[0].mxu0
        %v462 = vadd.f32 %v353, %v461
        %v463 = vpop.f32.mrb[0].mxu0
        %v464 = vpop.f32.mrb[0].mxu0
        %v465 = vadd.f32 %v353, %v464
        %v466 = vpop.f32.mrb[0].mxu0
        %467 = vmatprep.mubr.bf16.mxu0 0
        %468 = vmatmul.mubr.bf16.gmra.mrb[0].mxu0 %v372
        %v469 = vpop.f32.mrb[0].mxu0
        %v470 = vadd.f32 %v353, %v469
        %v471 = vpop.f32.mrb[0].mxu0
        %v472 = vpop.f32.mrb[0].mxu0
        %v473 = vadd.f32 %v353, %v472
        %v474 = vpop.f32.mrb[0].mxu0
        %475 = vmatprep.mubr.bf16.mxu0 0
        %476 = vmatmul.mubr.bf16.gmra.mrb[0].mxu0 %v373
        %v477 = vpop.f32.mrb[0].mxu0
        %v478 = vadd.f32 %v353, %v477
        %v479 = vpop.f32.mrb[0].mxu0
        %v480 = vpop.f32.mrb[0].mxu0
        %v481 = vadd.f32 %v353, %v480
        %v482 = vpop.f32.mrb[0].mxu0
        %483 = vmatprep.mubr.bf16.mxu0 0
        %484 = vmatmul.mubr.bf16.gmra.mrb[0].mxu0 %v374
        %v485 = vpop.f32.mrb[0].mxu0
        %v486 = vadd.f32 %v353, %v485
        %v487 = vpop.f32.mrb[0].mxu0
        %v488 = vpop.f32.mrb[0].mxu0
        %v489 = vadd.f32 %v353, %v488
        %v490 = vpop.f32.mrb[0].mxu0
        %491 = vdwg.mxu0
        %v492 = vld [vmem:[%s320] sm:$0x1]
        %v493 = vld [vmem:[%s320 + $0x1] sm:$0x1]
        %v494 = vld [vmem:[%s320 + $0x2] sm:$0x1]
        %v495 = vld [vmem:[%s320 + $0x3] sm:$0x1]
        %v500 = vlaneseq
        %v501 = vshrl.u32 %v500, 7
        %v502 = vsub.s32 0, %v501
        %v503 = vrot.slane %v492, %v502
        %v504 = vlaneseq
        %v505 = vshrl.u32 %v504, 7
        %v506 = vsub.s32 0, %v505
        %v507 = vrot.slane %v493, %v506
        %v508 = vlaneseq
        %v509 = vshrl.u32 %v508, 7
        %v510 = vsub.s32 0, %v509
        %v511 = vrot.slane %v494, %v510
        %v512 = vlaneseq
        %v513 = vshrl.u32 %v512, 7
        %v514 = vsub.s32 0, %v513
        %v515 = vrot.slane %v495, %v514
        %v520 = vadd.f32 %v462, %v503
        %v521 = vadd.f32 %v465, %v503
        %v522 = vadd.f32 %v470, %v507
        %v523 = vadd.f32 %v473, %v507
        %v524 = vadd.f32 %v478, %v511
        %v525 = vadd.f32 %v481, %v511
        %v526 = vadd.f32 %v486, %v515
        %v527 = vadd.f32 %v489, %v515
        %v528 = vtanh.pop %v520
        %v529 = vtanh.pop %v521
        %v530 = vtanh.pop %v522
        %v531 = vtanh.pop %v523
        %v532 = vtanh.pop %v524
        %v533 = vtanh.pop %v525
        %v534 = vtanh.pop %v526
        %v535 = vtanh.pop %v527
        %v536 = vld [vmem:[%s5] sm:$0x1]
        %v537 = vld [vmem:[#allocation2] sm:$0x1]
        %539 = vset.pattern.permute.xlu0 0
        %540 = vperm.xlu0 %539, %v537
        %v541 = vpop.permute.xlu0 %540
        %v543 = vlaneseq
        %v544 = vshrl.u32 %v543, 7
        %v545 = vsub.s32 0, %v544
        %v546 = vrot.slane %v541, %v545
        %547 = vmatprep.subr.mxu0 0.0
        %548 = vmatpush1.xpose.msra.mxu0 %v528
        %549 = vmatprep.subr.mxu0 0.0
        %550 = vmatpush1.xpose.msra.mxu0 %v529
        %551 = vmatprep.subr.mxu0 0.0
        %552 = vmatpush1.xpose.msra.mxu0 0.0
        %553 = vmatprep.subr.mxu0 0.0
        %554 = vmatpush1.xpose.msra.mxu0 0.0
        %555 = vmatprep.subr.mxu0 0.0
        %556 = vmatpush1.xpose.msra.mxu0 0.0
        %557 = vmatprep.subr.mxu0 0.0
        %558 = vmatpush1.xpose.msra.mxu0 0.0
        %559 = vmatprep.subr.mxu0 0.0
        %560 = vmatpush1.xpose.msra.mxu0 0.0
        %561 = vmatprep.subr.mxu0 0.0
        %562 = vmatpush1.xpose.msra.mxu0 0.0
        %563 = vmatprep.subr.mxu0 0.0
        %564 = vmatpush1.xpose.msra.mxu0 0.0
        %565 = vmatprep.subr.mxu0 0.0
        %566 = vmatpush1.xpose.msra.mxu0 0.0
        %567 = vmatprep.subr.mxu0 0.0
        %568 = vmatpush1.xpose.msra.mxu0 0.0
        %569 = vmatprep.subr.mxu0 0.0
        %570 = vmatpush1.xpose.msra.mxu0 0.0
        %571 = vmatprep.subr.mxu0 0.0
        %572 = vmatpush1.xpose.msra.mxu0 0.0
        %573 = vmatprep.subr.mxu0 0.0
        %574 = vmatpush1.xpose.msra.mxu0 0.0
        %575 = vmatprep.subr.mxu0 0.0
        %576 = vmatpush1.xpose.msra.mxu0 0.0
        %577 = vmatprep.subr.mxu0 0.0
        %578 = vmatpush1.xpose.msra.mxu0 0.0
        %579 = vmatprep.subr.mxu0 0.0
        %580 = vmatpush1.xpose.msra.mxu0 0.0
        %581 = vmatprep.subr.mxu0 0.0
        %582 = vmatpush1.xpose.msra.mxu0 0.0
        %583 = vmatprep.subr.mxu0 0.0
        %584 = vmatpush1.xpose.msra.mxu0 0.0
        %585 = vmatprep.subr.mxu0 0.0
        %586 = vmatpush1.xpose.msra.mxu0 0.0
        %587 = vmatprep.subr.mxu0 0.0
        %588 = vmatpush1.xpose.msra.mxu0 0.0
        %589 = vmatprep.subr.mxu0 0.0
        %590 = vmatpush1.xpose.msra.mxu0 0.0
        %591 = vmatprep.subr.mxu0 0.0
        %592 = vmatpush1.xpose.msra.mxu0 0.0
        %593 = vmatprep.subr.mxu0 0.0
        %594 = vmatpush1.xpose.msra.mxu0 0.0
        %595 = vmatprep.subr.mxu0 0.0
        %596 = vmatpush1.xpose.msra.mxu0 0.0
        %597 = vmatprep.subr.mxu0 0.0
        %598 = vmatpush1.xpose.msra.mxu0 0.0
        %599 = vmatprep.subr.mxu0 0.0
        %600 = vmatpush1.xpose.msra.mxu0 0.0
        %601 = vmatprep.subr.mxu0 0.0
        %602 = vmatpush1.xpose.msra.mxu0 0.0
        %603 = vmatprep.subr.mxu0 0.0
        %604 = vmatpush1.xpose.msra.mxu0 0.0
        %605 = vmatprep.subr.mxu0 0.0
        %606 = vmatpush1.xpose.msra.mxu0 0.0
        %607 = vmatprep.subr.mxu0 0.0
        %608 = vmatpush1.xpose.msra.mxu0 0.0
        %609 = vmatprep.subr.mxu0 0.0
        %610 = vmatpush1.xpose.msra.mxu0 0.0
        %611 = vmatprep.mubr.f32.mxu0 0.0
        %612 = vmatmul.mubr.f32.gmra.mrb[0].mxu0 %v536
        %v613 = vpop.f32.mrb[0].mxu0
        %v614 = vadd.f32 %v546, %v613
        %v615 = vpop.f32.mrb[0].mxu0
        %616 = vdwg.mxu0
        %617 = vmatprep.subr.mxu0 0.0
        %618 = vmatpush1.xpose.msra.mxu0 %v530
        %619 = vmatprep.subr.mxu0 0.0
        %620 = vmatpush1.xpose.msra.mxu0 %v531
        %621 = vmatprep.subr.mxu0 0.0
        %622 = vmatpush1.xpose.msra.mxu0 0.0
        %623 = vmatprep.subr.mxu0 0.0
        %624 = vmatpush1.xpose.msra.mxu0 0.0
        %625 = vmatprep.subr.mxu0 0.0
        %626 = vmatpush1.xpose.msra.mxu0 0.0
        %627 = vmatprep.subr.mxu0 0.0
        %628 = vmatpush1.xpose.msra.mxu0 0.0
        %629 = vmatprep.subr.mxu0 0.0
        %630 = vmatpush1.xpose.msra.mxu0 0.0
        %631 = vmatprep.subr.mxu0 0.0
        %632 = vmatpush1.xpose.msra.mxu0 0.0
        %633 = vmatprep.subr.mxu0 0.0
        %634 = vmatpush1.xpose.msra.mxu0 0.0
        %635 = vmatprep.subr.mxu0 0.0
        %636 = vmatpush1.xpose.msra.mxu0 0.0
        %637 = vmatprep.subr.mxu0 0.0
        %638 = vmatpush1.xpose.msra.mxu0 0.0
        %639 = vmatprep.subr.mxu0 0.0
        %640 = vmatpush1.xpose.msra.mxu0 0.0
        %641 = vmatprep.subr.mxu0 0.0
        %642 = vmatpush1.xpose.msra.mxu0 0.0
        %643 = vmatprep.subr.mxu0 0.0
        %644 = vmatpush1.xpose.msra.mxu0 0.0
        %645 = vmatprep.subr.mxu0 0.0
        %646 = vmatpush1.xpose.msra.mxu0 0.0
        %647 = vmatprep.subr.mxu0 0.0
        %648 = vmatpush1.xpose.msra.mxu0 0.0
        %649 = vmatprep.subr.mxu0 0.0
        %650 = vmatpush1.xpose.msra.mxu0 0.0
        %651 = vmatprep.subr.mxu0 0.0
        %652 = vmatpush1.xpose.msra.mxu0 0.0
        %653 = vmatprep.subr.mxu0 0.0
        %654 = vmatpush1.xpose.msra.mxu0 0.0
        %655 = vmatprep.subr.mxu0 0.0
        %656 = vmatpush1.xpose.msra.mxu0 0.0
        %657 = vmatprep.subr.mxu0 0.0
        %658 = vmatpush1.xpose.msra.mxu0 0.0
        %659 = vmatprep.subr.mxu0 0.0
        %660 = vmatpush1.xpose.msra.mxu0 0.0
        %661 = vmatprep.subr.mxu0 0.0
        %662 = vmatpush1.xpose.msra.mxu0 0.0
        %663 = vmatprep.subr.mxu0 0.0
        %664 = vmatpush1.xpose.msra.mxu0 0.0
        %665 = vmatprep.subr.mxu0 0.0
        %666 = vmatpush1.xpose.msra.mxu0 0.0
        %667 = vmatprep.subr.mxu0 0.0
        %668 = vmatpush1.xpose.msra.mxu0 0.0
        %669 = vmatprep.subr.mxu0 0.0
        %670 = vmatpush1.xpose.msra.mxu0 0.0
        %671 = vmatprep.subr.mxu0 0.0
        %672 = vmatpush1.xpose.msra.mxu0 0.0
        %673 = vmatprep.subr.mxu0 0.0
        %674 = vmatpush1.xpose.msra.mxu0 0.0
        %675 = vmatprep.subr.mxu0 0.0
        %676 = vmatpush1.xpose.msra.mxu0 0.0
        %677 = vmatprep.subr.mxu0 0.0
        %678 = vmatpush1.xpose.msra.mxu0 0.0
        %679 = vmatprep.subr.mxu0 0.0
        %680 = vmatpush1.xpose.msra.mxu0 0.0
        %681 = vmatprep.mubr.f32.mxu0 0.0
        %682 = vmatmul.mubr.f32.gmra.mrb[0].mxu0 %v536
        %v683 = vpop.f32.mrb[0].mxu0
        %v684 = vadd.f32 %v546, %v683
        %v685 = vpop.f32.mrb[0].mxu0
        %686 = vdwg.mxu0
        %687 = vmatprep.subr.mxu0 0.0
        %688 = vmatpush1.xpose.msra.mxu0 %v532
        %689 = vmatprep.subr.mxu0 0.0
        %690 = vmatpush1.xpose.msra.mxu0 %v533
        %691 = vmatprep.subr.mxu0 0.0
        %692 = vmatpush1.xpose.msra.mxu0 0.0
        %693 = vmatprep.subr.mxu0 0.0
        %694 = vmatpush1.xpose.msra.mxu0 0.0
        %695 = vmatprep.subr.mxu0 0.0
        %696 = vmatpush1.xpose.msra.mxu0 0.0
        %697 = vmatprep.subr.mxu0 0.0
        %698 = vmatpush1.xpose.msra.mxu0 0.0
        %699 = vmatprep.subr.mxu0 0.0
        %700 = vmatpush1.xpose.msra.mxu0 0.0
        %701 = vmatprep.subr.mxu0 0.0
        %702 = vmatpush1.xpose.msra.mxu0 0.0
        %703 = vmatprep.subr.mxu0 0.0
        %704 = vmatpush1.xpose.msra.mxu0 0.0
        %705 = vmatprep.subr.mxu0 0.0
        %706 = vmatpush1.xpose.msra.mxu0 0.0
        %707 = vmatprep.subr.mxu0 0.0
        %708 = vmatpush1.xpose.msra.mxu0 0.0
        %709 = vmatprep.subr.mxu0 0.0
        %710 = vmatpush1.xpose.msra.mxu0 0.0
        %711 = vmatprep.subr.mxu0 0.0
        %712 = vmatpush1.xpose.msra.mxu0 0.0
        %713 = vmatprep.subr.mxu0 0.0
        %714 = vmatpush1.xpose.msra.mxu0 0.0
        %715 = vmatprep.subr.mxu0 0.0
        %716 = vmatpush1.xpose.msra.mxu0 0.0
        %717 = vmatprep.subr.mxu0 0.0
        %718 = vmatpush1.xpose.msra.mxu0 0.0
        %719 = vmatprep.subr.mxu0 0.0
        %720 = vmatpush1.xpose.msra.mxu0 0.0
        %721 = vmatprep.subr.mxu0 0.0
        %722 = vmatpush1.xpose.msra.mxu0 0.0
        %723 = vmatprep.subr.mxu0 0.0
        %724 = vmatpush1.xpose.msra.mxu0 0.0
        %725 = vmatprep.subr.mxu0 0.0
        %726 = vmatpush1.xpose.msra.mxu0 0.0
        %727 = vmatprep.subr.mxu0 0.0
        %728 = vmatpush1.xpose.msra.mxu0 0.0
        %729 = vmatprep.subr.mxu0 0.0
        %730 = vmatpush1.xpose.msra.mxu0 0.0
        %731 = vmatprep.subr.mxu0 0.0
        %732 = vmatpush1.xpose.msra.mxu0 0.0
        %733 = vmatprep.subr.mxu0 0.0
        %734 = vmatpush1.xpose.msra.mxu0 0.0
        %735 = vmatprep.subr.mxu0 0.0
        %736 = vmatpush1.xpose.msra.mxu0 0.0
        %737 = vmatprep.subr.mxu0 0.0
        %738 = vmatpush1.xpose.msra.mxu0 0.0
        %739 = vmatprep.subr.mxu0 0.0
        %740 = vmatpush1.xpose.msra.mxu0 0.0
        %741 = vmatprep.subr.mxu0 0.0
        %742 = vmatpush1.xpose.msra.mxu0 0.0
        %743 = vmatprep.subr.mxu0 0.0
        %744 = vmatpush1.xpose.msra.mxu0 0.0
        %745 = vmatprep.subr.mxu0 0.0
        %746 = vmatpush1.xpose.msra.mxu0 0.0
        %747 = vmatprep.subr.mxu0 0.0
        %748 = vmatpush1.xpose.msra.mxu0 0.0
        %749 = vmatprep.subr.mxu0 0.0
        %750 = vmatpush1.xpose.msra.mxu0 0.0
        %751 = vmatprep.mubr.f32.mxu0 0.0
        %752 = vmatmul.mubr.f32.gmra.mrb[0].mxu0 %v536
        %v753 = vpop.f32.mrb[0].mxu0
        %v754 = vadd.f32 %v546, %v753
        %v755 = vpop.f32.mrb[0].mxu0
        %756 = vdwg.mxu0
        %757 = vmatprep.subr.mxu0 0.0
        %758 = vmatpush1.xpose.msra.mxu0 %v534
        %759 = vmatprep.subr.mxu0 0.0
        %760 = vmatpush1.xpose.msra.mxu0 %v535
        %761 = vmatprep.subr.mxu0 0.0
        %762 = vmatpush1.xpose.msra.mxu0 0.0
        %763 = vmatprep.subr.mxu0 0.0
        %764 = vmatpush1.xpose.msra.mxu0 0.0
        %765 = vmatprep.subr.mxu0 0.0
        %766 = vmatpush1.xpose.msra.mxu0 0.0
        %767 = vmatprep.subr.mxu0 0.0
        %768 = vmatpush1.xpose.msra.mxu0 0.0
        %769 = vmatprep.subr.mxu0 0.0
        %770 = vmatpush1.xpose.msra.mxu0 0.0
        %771 = vmatprep.subr.mxu0 0.0
        %772 = vmatpush1.xpose.msra.mxu0 0.0
        %773 = vmatprep.subr.mxu0 0.0
        %774 = vmatpush1.xpose.msra.mxu0 0.0
        %775 = vmatprep.subr.mxu0 0.0
        %776 = vmatpush1.xpose.msra.mxu0 0.0
        %777 = vmatprep.subr.mxu0 0.0
        %778 = vmatpush1.xpose.msra.mxu0 0.0
        %779 = vmatprep.subr.mxu0 0.0
        %780 = vmatpush1.xpose.msra.mxu0 0.0
        %781 = vmatprep.subr.mxu0 0.0
        %782 = vmatpush1.xpose.msra.mxu0 0.0
        %783 = vmatprep.subr.mxu0 0.0
        %784 = vmatpush1.xpose.msra.mxu0 0.0
        %785 = vmatprep.subr.mxu0 0.0
        %786 = vmatpush1.xpose.msra.mxu0 0.0
        %787 = vmatprep.subr.mxu0 0.0
        %788 = vmatpush1.xpose.msra.mxu0 0.0
        %789 = vmatprep.subr.mxu0 0.0
        %790 = vmatpush1.xpose.msra.mxu0 0.0
        %791 = vmatprep.subr.mxu0 0.0
        %792 = vmatpush1.xpose.msra.mxu0 0.0
        %793 = vmatprep.subr.mxu0 0.0
        %794 = vmatpush1.xpose.msra.mxu0 0.0
        %795 = vmatprep.subr.mxu0 0.0
        %796 = vmatpush1.xpose.msra.mxu0 0.0
        %797 = vmatprep.subr.mxu0 0.0
        %798 = vmatpush1.xpose.msra.mxu0 0.0
        %799 = vmatprep.subr.mxu0 0.0
        %800 = vmatpush1.xpose.msra.mxu0 0.0
        %801 = vmatprep.subr.mxu0 0.0
        %802 = vmatpush1.xpose.msra.mxu0 0.0
        %803 = vmatprep.subr.mxu0 0.0
        %804 = vmatpush1.xpose.msra.mxu0 0.0
        %805 = vmatprep.subr.mxu0 0.0
        %806 = vmatpush1.xpose.msra.mxu0 0.0
        %807 = vmatprep.subr.mxu0 0.0
        %808 = vmatpush1.xpose.msra.mxu0 0.0
        %809 = vmatprep.subr.mxu0 0.0
        %810 = vmatpush1.xpose.msra.mxu0 0.0
        %811 = vmatprep.subr.mxu0 0.0
        %812 = vmatpush1.xpose.msra.mxu0 0.0
        %813 = vmatprep.subr.mxu0 0.0
        %814 = vmatpush1.xpose.msra.mxu0 0.0
        %815 = vmatprep.subr.mxu0 0.0
        %816 = vmatpush1.xpose.msra.mxu0 0.0
        %817 = vmatprep.subr.mxu0 0.0
        %818 = vmatpush1.xpose.msra.mxu0 0.0
        %819 = vmatprep.subr.mxu0 0.0
        %820 = vmatpush1.xpose.msra.mxu0 0.0
        %821 = vmatprep.mubr.f32.mxu0 0.0
        %822 = vmatmul.mubr.f32.gmra.mrb[0].mxu0 %v536
        %v823 = vpop.f32.mrb[0].mxu0
        %v824 = vadd.f32 %v546, %v823
        %v825 = vpop.f32.mrb[0].mxu0
        %826 = vdwg.mxu0
        %vm827 = vcmask 122880
        %v828 = vsel %vm827, %v614, -inf
        %829 = vmax.xlane.f32.xlu0 %v828
        %v830 = vpop.xlane.xlu0 %829
        %v831 = vsel %vm827, %v684, -inf
        %832 = vmax.xlane.f32.xlu0 %v831
        %v833 = vpop.xlane.xlu0 %832
        %v834 = vsel %vm827, %v754, -inf
        %835 = vmax.xlane.f32.xlu0 %v834
        %v836 = vpop.xlane.xlu0 %835
        %v837 = vsel %vm827, %v824, -inf
        %838 = vmax.xlane.f32.xlu0 %v837
        %v839 = vpop.xlane.xlu0 %838
        %v840 = vsub.f32 %v614, %v830
        %v841 = vsub.f32 %v684, %v833
        %v842 = vsub.f32 %v754, %v836
        %v843 = vsub.f32 %v824, %v839
        %v844 = vmul.f32 %v840, 1.442695
        %v845 = vpow.pop %v844
        %v846 = vmul.f32 %v841, 1.442695
        %v847 = vpow.pop %v846
        %v848 = vmul.f32 %v842, 1.442695
        %v849 = vpow.pop %v848
        %v850 = vmul.f32 %v843, 1.442695
        %v851 = vpow.pop %v850
        %v852 = vsel %vm827, %v845, 0.0
        %853 = vadd.xlane.f32.xlu0 %v852
        %v854 = vpop.xlane.xlu0 %853
        %v855 = vsel %vm827, %v847, 0.0
        %856 = vadd.xlane.f32.xlu0 %v855
        %v857 = vpop.xlane.xlu0 %856
        %v858 = vsel %vm827, %v849, 0.0
        %859 = vadd.xlane.f32.xlu0 %v858
        %v860 = vpop.xlane.xlu0 %859
        %v861 = vsel %vm827, %v851, 0.0
        %862 = vadd.xlane.f32.xlu0 %v861
        %v863 = vpop.xlane.xlu0 %862
        %v864 = vpack.c.bf16 %v845, %v845
        %v865 = vpack.c.bf16 %v847, %v847
        %v866 = vpack.c.bf16 %v849, %v849
        %v867 = vpack.c.bf16 %v851, %v851
        %vm868 = vcmask 130048
        %v870 = vsel %vm868, %v864, 0
        %872 = vmatprep.subr.bf16.mxu0 0
        %873 = vmatpush1.bf16.msra.mxu0 %v371
        %874 = vmatprep.subr.bf16.mxu0 0
        %875 = vmatpush1.bf16.msra.mxu0 0
        %876 = vmatprep.subr.bf16.mxu0 0
        %877 = vmatpush1.bf16.msra.mxu0 0
        %878 = vmatprep.subr.bf16.mxu0 0
        %879 = vmatpush1.bf16.msra.mxu0 0
        %880 = vmatprep.subr.bf16.mxu0 0
        %881 = vmatpush1.bf16.msra.mxu0 0
        %882 = vmatprep.subr.bf16.mxu0 0
        %883 = vmatpush1.bf16.msra.mxu0 0
        %884 = vmatprep.subr.bf16.mxu0 0
        %885 = vmatpush1.bf16.msra.mxu0 0
        %886 = vmatprep.subr.bf16.mxu0 0
        %887 = vmatpush1.bf16.msra.mxu0 0
        %888 = vmatprep.subr.bf16.mxu0 0
        %889 = vmatpush1.bf16.msra.mxu0 0
        %890 = vmatprep.subr.bf16.mxu0 0
        %891 = vmatpush1.bf16.msra.mxu0 0
        %892 = vmatprep.subr.bf16.mxu0 0
        %893 = vmatpush1.bf16.msra.mxu0 0
        %894 = vmatprep.subr.bf16.mxu0 0
        %895 = vmatpush1.bf16.msra.mxu0 0
        %896 = vmatprep.subr.bf16.mxu0 0
        %897 = vmatpush1.bf16.msra.mxu0 0
        %898 = vmatprep.subr.bf16.mxu0 0
        %899 = vmatpush1.bf16.msra.mxu0 0
        %900 = vmatprep.subr.bf16.mxu0 0
        %901 = vmatpush1.bf16.msra.mxu0 0
        %902 = vmatprep.subr.bf16.mxu0 0
        %903 = vmatpush1.bf16.msra.mxu0 0
        %904 = vmatprep.mubr.bf16.mxu0 0
        %905 = vmatmul.mubr.bf16.gmra.mrb[0].mxu0 %v870
        %v906 = vpop.f32.mrb[0].mxu0
        %v907 = vadd.f32 0.0, %v906
        %v908 = vpop.f32.mrb[0].mxu0
        %v909 = vpop.f32.mrb[0].mxu0
        %v910 = vpop.f32.mrb[0].mxu0
        %911 = vdwg.mxu0
        %v913 = vsel %vm868, %v865, 0
        %915 = vmatprep.subr.bf16.mxu0 0
        %916 = vmatpush1.bf16.msra.mxu0 %v372
        %917 = vmatprep.subr.bf16.mxu0 0
        %918 = vmatpush1.bf16.msra.mxu0 0
        %919 = vmatprep.subr.bf16.mxu0 0
        %920 = vmatpush1.bf16.msra.mxu0 0
        %921 = vmatprep.subr.bf16.mxu0 0
        %922 = vmatpush1.bf16.msra.mxu0 0
        %923 = vmatprep.subr.bf16.mxu0 0
        %924 = vmatpush1.bf16.msra.mxu0 0
        %925 = vmatprep.subr.bf16.mxu0 0
        %926 = vmatpush1.bf16.msra.mxu0 0
        %927 = vmatprep.subr.bf16.mxu0 0
        %928 = vmatpush1.bf16.msra.mxu0 0
        %929 = vmatprep.subr.bf16.mxu0 0
        %930 = vmatpush1.bf16.msra.mxu0 0
        %931 = vmatprep.subr.bf16.mxu0 0
        %932 = vmatpush1.bf16.msra.mxu0 0
        %933 = vmatprep.subr.bf16.mxu0 0
        %934 = vmatpush1.bf16.msra.mxu0 0
        %935 = vmatprep.subr.bf16.mxu0 0
        %936 = vmatpush1.bf16.msra.mxu0 0
        %937 = vmatprep.subr.bf16.mxu0 0
        %938 = vmatpush1.bf16.msra.mxu0 0
        %939 = vmatprep.subr.bf16.mxu0 0
        %940 = vmatpush1.bf16.msra.mxu0 0
        %941 = vmatprep.subr.bf16.mxu0 0
        %942 = vmatpush1.bf16.msra.mxu0 0
        %943 = vmatprep.subr.bf16.mxu0 0
        %944 = vmatpush1.bf16.msra.mxu0 0
        %945 = vmatprep.subr.bf16.mxu0 0
        %946 = vmatpush1.bf16.msra.mxu0 0
        %947 = vmatprep.mubr.bf16.mxu0 0
        %948 = vmatmul.mubr.bf16.gmra.mrb[0].mxu0 %v913
        %v949 = vpop.f32.mrb[0].mxu0
        %v950 = vadd.f32 0.0, %v949
        %v951 = vpop.f32.mrb[0].mxu0
        %v952 = vpop.f32.mrb[0].mxu0
        %v953 = vpop.f32.mrb[0].mxu0
        %954 = vdwg.mxu0
        %v956 = vsel %vm868, %v866, 0
        %958 = vmatprep.subr.bf16.mxu0 0
        %959 = vmatpush1.bf16.msra.mxu0 %v373
        %960 = vmatprep.subr.bf16.mxu0 0
        %961 = vmatpush1.bf16.msra.mxu0 0
        %962 = vmatprep.subr.bf16.mxu0 0
        %963 = vmatpush1.bf16.msra.mxu0 0
        %964 = vmatprep.subr.bf16.mxu0 0
        %965 = vmatpush1.bf16.msra.mxu0 0
        %966 = vmatprep.subr.bf16.mxu0 0
        %967 = vmatpush1.bf16.msra.mxu0 0
        %968 = vmatprep.subr.bf16.mxu0 0
        %969 = vmatpush1.bf16.msra.mxu0 0
        %970 = vmatprep.subr.bf16.mxu0 0
        %971 = vmatpush1.bf16.msra.mxu0 0
        %972 = vmatprep.subr.bf16.mxu0 0
        %973 = vmatpush1.bf16.msra.mxu0 0
        %974 = vmatprep.subr.bf16.mxu0 0
        %975 = vmatpush1.bf16.msra.mxu0 0
        %976 = vmatprep.subr.bf16.mxu0 0
        %977 = vmatpush1.bf16.msra.mxu0 0
        %978 = vmatprep.subr.bf16.mxu0 0
        %979 = vmatpush1.bf16.msra.mxu0 0
        %980 = vmatprep.subr.bf16.mxu0 0
        %981 = vmatpush1.bf16.msra.mxu0 0
        %982 = vmatprep.subr.bf16.mxu0 0
        %983 = vmatpush1.bf16.msra.mxu0 0
        %984 = vmatprep.subr.bf16.mxu0 0
        %985 = vmatpush1.bf16.msra.mxu0 0
        %986 = vmatprep.subr.bf16.mxu0 0
        %987 = vmatpush1.bf16.msra.mxu0 0
        %988 = vmatprep.subr.bf16.mxu0 0
        %989 = vmatpush1.bf16.msra.mxu0 0
        %990 = vmatprep.mubr.bf16.mxu0 0
        %991 = vmatmul.mubr.bf16.gmra.mrb[0].mxu0 %v956
        %v992 = vpop.f32.mrb[0].mxu0
        %v993 = vadd.f32 0.0, %v992
        %v994 = vpop.f32.mrb[0].mxu0
        %v995 = vpop.f32.mrb[0].mxu0
        %v996 = vpop.f32.mrb[0].mxu0
        %997 = vdwg.mxu0
        %v999 = vsel %vm868, %v867, 0
        %1001 = vmatprep.subr.bf16.mxu0 0
        %1002 = vmatpush1.bf16.msra.mxu0 %v374
        %1003 = vmatprep.subr.bf16.mxu0 0
        %1004 = vmatpush1.bf16.msra.mxu0 0
        %1005 = vmatprep.subr.bf16.mxu0 0
        %1006 = vmatpush1.bf16.msra.mxu0 0
        %1007 = vmatprep.subr.bf16.mxu0 0
        %1008 = vmatpush1.bf16.msra.mxu0 0
        %1009 = vmatprep.subr.bf16.mxu0 0
        %1010 = vmatpush1.bf16.msra.mxu0 0
        %1011 = vmatprep.subr.bf16.mxu0 0
        %1012 = vmatpush1.bf16.msra.mxu0 0
        %1013 = vmatprep.subr.bf16.mxu0 0
        %1014 = vmatpush1.bf16.msra.mxu0 0
        %1015 = vmatprep.subr.bf16.mxu0 0
        %1016 = vmatpush1.bf16.msra.mxu0 0
        %1017 = vmatprep.subr.bf16.mxu0 0
        %1018 = vmatpush1.bf16.msra.mxu0 0
        %1019 = vmatprep.subr.bf16.mxu0 0
        %1020 = vmatpush1.bf16.msra.mxu0 0
        %1021 = vmatprep.subr.bf16.mxu0 0
        %1022 = vmatpush1.bf16.msra.mxu0 0
        %1023 = vmatprep.subr.bf16.mxu0 0
        %1024 = vmatpush1.bf16.msra.mxu0 0
        %1025 = vmatprep.subr.bf16.mxu0 0
        %1026 = vmatpush1.bf16.msra.mxu0 0
        %1027 = vmatprep.subr.bf16.mxu0 0
        %1028 = vmatpush1.bf16.msra.mxu0 0
        %1029 = vmatprep.subr.bf16.mxu0 0
        %1030 = vmatpush1.bf16.msra.mxu0 0
        %1031 = vmatprep.subr.bf16.mxu0 0
        %1032 = vmatpush1.bf16.msra.mxu0 0
        %1033 = vmatprep.mubr.bf16.mxu0 0
        %1034 = vmatmul.mubr.bf16.gmra.mrb[0].mxu0 %v999
        %v1035 = vpop.f32.mrb[0].mxu0
        %v1036 = vadd.f32 0.0, %v1035
        %v1037 = vpop.f32.mrb[0].mxu0
        %v1038 = vpop.f32.mrb[0].mxu0
        %v1039 = vpop.f32.mrb[0].mxu0
        %1040 = vdwg.mxu0
        %v1041 = vrcp.pop %v854
        %v1042 = vrcp.pop %v857
        %v1043 = vrcp.pop %v860
        %v1044 = vrcp.pop %v863
        %v1045 = vmul.f32 %v907, %v1041
        %v1046 = vmul.f32 %v950, %v1042
        %v1047 = vmul.f32 %v993, %v1043
        %v1048 = vmul.f32 %v1036, %v1044
        %v1049 = vld [vmem:[%s315] sm:$0x1]
        %v1050 = vld [vmem:[%s315 + $0x1] sm:$0x1]
        %v1051 = vld [vmem:[%s315 + $0x2] sm:$0x1]
        %v1052 = vld [vmem:[%s315 + $0x3] sm:$0x1]
        %v1053 = vadd.f32 %v1045, %v1049
        %v1054 = vadd.f32 %v1046, %v1050
        %v1055 = vadd.f32 %v1047, %v1051
        %v1056 = vadd.f32 %v1048, %v1052
        %1057 = vst [vmem:[%s304] sm:$0x1] %v1053
        %1058 = vst [vmem:[%s304 + $0x1] sm:$0x1] %v1054
        %1059 = vst [vmem:[%s304 + $0x2] sm:$0x1] %v1055
        %1060 = vst [vmem:[%s304 + $0x3] sm:$0x1] %v1056
        %s1061 = sand.u32 %s193, 1
        %s1062 = scalar_lea.sflag [#allocation4], %s1061
        %s1063 = sand.u32 %s193, 1
        %s1064 = smul.addr %s1063, 4
        %s1065 = scalar_lea.vmem [#allocation3], %s1064
        // Predicated region
        $region49: #{attention_forward.1} parent=47 // pred_check
          %p1066 = pneg %p203
        $region50: #{attention_forward.1} parent=47 // pred_check_branch
          %1068 = sbr.rel (%p1066) target = $region52
        $region51: #{attention_forward.1} parent=47 // pred_region
          %s1069 = smul.u32 4, %s23
          %s1071 = ssub.s32 64, 64
          %1072 = vsyncadd %s1062, %s1071
          %s1073 = smul.addr %s1069, 16
          %s1074 = scalar_lea.hbm %s7, %s1073
          %s1075 = sshll.u32 %s1065, 4
          %s1076 = int_to_ptr.vmem [resolvable:$true] %s1075
          %1081 = dma.vmem_to_hbm [thread:$0]  %s1076, 64, %s1074, %s1062, 16, 16, 1
        $region52: #{attention_forward.1} parent=47 // pred_fallthru
          _
      $region48: #{attention_forward.1} parent=5 // pred_fallthru
        _
      %p1082 = scmp.le.s32.totalorder 2, %s18
      // Predicated region
      $region53: #{attention_forward.1} parent=5 // pred_check
        %p1083 = pneg %p1082
      $region54: #{attention_forward.1} parent=5 // pred_check_branch
        %1085 = sbr.rel (%p1083) target = $region56
      $region55: #{attention_forward.1} parent=5 // pred_region
        %s1086 = ssub.s32 %s18, 2
        // Predicated region
        $region57: #{attention_forward.1} parent=55 // pred_check
          %p1087 = pneg %p209
        $region58: #{attention_forward.1} parent=55 // pred_check_branch
          %1089 = sbr.rel (%p1087) target = $region60
        $region59: #{attention_forward.1} parent=55 // pred_region
          %s1090 = sand.u32 %s194, 1
          %s1091 = scalar_lea.sflag [#allocation4], %s1090
          %s1092 = sand.u32 %s194, 1
          %s1093 = smul.addr %s1092, 4
          %s1094 = scalar_lea.vmem [#allocation3], %s1093
          %1095 = dma.done %s1091, 64
        $region60: #{attention_forward.1} parent=55 // pred_fallthru
          _
      $region56: #{attention_forward.1} parent=5 // pred_fallthru
        _
    $region6: #{attention_forward.1} parent=1 // loop_footer
      %s22 = sadd.s32 1, %s18
    $region7: #{attention_forward.1} parent=1 // loop_footer_branch
      %17 = sbr.rel target = $region3
    $region8: #{attention_forward.1} parent=1 // loop_exit
      _
    %1096 = vsyncpa [#allocation4], 1
    %s1097 = scalar_lea.sflag [#allocation4], 1
    %1098 = vsyncpa %s1097, 1

</llo_original>
